<compile_context>
chip_gen: v7x
topology: tpu7x:2x2x1
jax: 0.10.0
libtpu: 0.0.40
codegen_flags: <defaults>
</compile_context>

<pallas_src>
import functools

import numpy as np
import jax
import jax.numpy as jnp
from jax import lax
from jax.experimental import pallas as pl
from jax.experimental.pallas import tpu as pltpu


def _dsconv_kernel(x_ref, wb_ref, bias_ref, o_ref, band_ref, *,
                   Nb, H, W, Cin, Cout, K, pad, slot):
    """One batch block (Nb images) per grid step.

    x_ref   : (Nb, H, slot)          input rows, lane-padded (col*Cin + chan, then 0s)
    wb_ref  : (K*slot, Wp*Cout)      fused banded depthwise+pointwise weight
                                     (border output columns have zero weight)
    bias_ref: (Hp, Wp*Cout)          f32 bias slab (interior: pw@b_dw+b_pw, border: b_pw)
    o_ref   : (Nb, Hp, Wp*Cout)      lane-dense output block (single full-block store)
    band_ref: (Nb, Hp, K*slot)       VMEM scratch: row-band im2col matrix
    """
    Hd = H + 2 * pad - (K - 1)          # depthwise output height (stride 1)
    Wd = W + 2 * pad - (K - 1)
    Hp, Wp = Hd + 2 * pad, Wd + 2 * pad  # final output grid (pointwise is padded too)
    cdt = band_ref.dtype

    # ---- zero ONLY the halo rows of the band (rows the data copies below never
    #      touch); tiny, and re-done every step (megacore-safe).
    if pad > 0:
        band_ref[:, 0:pad, :] = jnp.zeros((Nb, pad, K * slot), cdt)
        band_ref[:, pad + Hd:Hp, :] = jnp.zeros((Nb, pad, K * slot), cdt)
    for ki in range(K):                                    # static loop, K = 3
        h_lo, h_hi = max(0, pad - ki), min(Hd, pad - ki + H)
        if h_lo > 0:
            band_ref[:, pad:pad + h_lo, ki * slot:(ki + 1) * slot] = (
                jnp.zeros((Nb, h_lo, slot), cdt))
        if h_hi < Hd:
            band_ref[:, pad + h_hi:pad + Hd, ki * slot:(ki + 1) * slot] = (
                jnp.zeros((Nb, Hd - h_hi, slot), cdt))

    # ---- scatter input rows into the K lane-tile-aligned tap slots (dense, 128-wide,
    #      lane offset ki*slot is a multiple of 128).
    x_f = x_ref[...]                                       # (Nb, H, slot)
    for ki in range(K):
        h_lo, h_hi = max(0, pad - ki), min(Hd, pad - ki + H)
        if h_lo < h_hi:
            band_ref[:, pad + h_lo:pad + h_hi, ki * slot:(ki + 1) * slot] = (
                x_f[:, h_lo + ki - pad:h_hi + ki - pad, :])

    # ---- fused depthwise(KxK) + pointwise(1x1) + both padded borders: ONE MXU
    #      matmul over all Hp rows / Wp*Cout columns, then bias + ReLU and a single
    #      full-block lane-dense store.
    band = band_ref[...].reshape(Nb * Hp, K * slot)        # Hp % 8 == 0 -> free reshape
    y = jnp.dot(band, wb_ref[...], preferred_element_type=jnp.float32)
    y = y.reshape(Nb, Hp, Wp * Cout) + bias_ref[...]       # f32 epilogue
    o_ref[...] = jnp.maximum(y, 0.0).astype(o_ref.dtype)


def _pick_batch_block(N, Hp):
    """Push GEMM M = Nb*Hp toward ~256 but keep >= 2 grid steps (two v7x TCs)."""
    target = max(1, -(-256 // Hp))
    cap = min(target, max(1, N // 2))
    nb = 1
    for d in range(1, cap + 1):
        if N % d == 0:
            nb = d
    return nb


def depthwise_separable_conv_block(x_nchw, w_dw, b_dw, w_pw, b_pw, *,
                                   kernel_size=3, stride=1, padding=1,
                                   batch_block=None, compute_dtype=jnp.float32):
    """Pallas implementation of DepthwiseSeparableConvBlock.forward (NCHW in/out)."""
    assert stride == 1, "only stride=1 (the module default) is implemented"

    N, Cin, H, W = x_nchw.shape
    Cout = w_pw.shape[0]
    K, pad = kernel_size, padding
    Hd, Wd = H + 2 * pad - (K - 1), W + 2 * pad - (K - 1)   # depthwise output size
    Hp, Wp = Hd + 2 * pad, Wd + 2 * pad                      # final output size
    slot = ((W * Cin + 127) // 128) * 128                    # lane-tile-aligned tap width
    f32 = jnp.float32
    cdt = compute_dtype

    if batch_block is None:
        batch_block = _pick_batch_block(N, Hp)
    Nb = batch_block
    assert N % Nb == 0, "batch_block must divide the batch size"

    # ---- layout glue: NCHW -> (N, H, W*Cin) rows, lane-padded to a multiple of 128
    #      (dense DMA rows; the pad lanes are the zero tails of each band tap slot).
    x_rows = jnp.transpose(x_nchw, (0, 2, 3, 1)).reshape(N, H, W * Cin).astype(cdt)
    if slot > W * Cin:
        x_rows = jnp.pad(x_rows, ((0, 0), (0, 0), (0, slot - W * Cin)))

    # ---- fold depthwise + pointwise into one banded (block-Toeplitz) weight covering
    #      ALL Wp output columns; border columns get zero weight. Horizontal input
    #      padding is absorbed here (input lanes are unpadded columns j = 0..W-1).
    #      wb[(ki, j, c), (wp, o)] = w_dw[c, ki, j - (wp-pad) + pad] * w_pw[o, c]
    dw = jnp.transpose(w_dw[:, 0].astype(f32), (1, 2, 0))               # (K, K, Cin)
    pw = w_pw[:, :, 0, 0].astype(f32)                                   # (Cout, Cin)
    fused = dw[:, :, :, None] * pw.T[None, None, :, :]                  # (K, K, Cin, Cout)
    jj = jnp.arange(W)[:, None, None]
    ww = jnp.arange(Wd)[None, :, None]
    kk = jnp.arange(K)[None, None, :]
    shift = (jj == ww - pad + kk).astype(f32)                           # (W, Wd, K)
    wb = jnp.einsum('jwm,kmco->kjcwo', shift, fused)                    # (K, W, Cin, Wd, Cout)
    wb = wb.reshape(K, W * Cin, Wd, Cout)
    wb = jnp.pad(wb, ((0, 0), (0, slot - W * Cin), (pad, pad), (0, 0)))  # lane pad + col border
    wb = wb.reshape(K * slot, Wp * Cout).astype(cdt)

    # ---- full (Hp, Wp*Cout) bias slab: interior = pw@b_dw + b_pw, every padded
    #      border row/column = b_pw (the GEMM contributes exactly 0 there).
    bf = pw @ b_dw.astype(f32) + b_pw.astype(f32)                       # (Cout,)
    b_brd = b_pw.astype(f32)
    row_int = jnp.concatenate([jnp.tile(b_brd, (pad, 1)),
                               jnp.tile(bf, (Wd, 1)),
                               jnp.tile(b_brd, (pad, 1))], axis=0)      # (Wp, Cout)
    row_brd = jnp.tile(b_brd, (Wp, 1))                                  # (Wp, Cout)
    bias = jnp.concatenate([jnp.tile(row_brd[None], (pad, 1, 1)),
                            jnp.tile(row_int[None], (Hd, 1, 1)),
                            jnp.tile(row_brd[None], (pad, 1, 1))], axis=0)
    bias = bias.reshape(Hp, Wp * Cout)                                  # f32 epilogue bias

    kernel = functools.partial(_dsconv_kernel, Nb=Nb, H=H, W=W, Cin=Cin,
                               Cout=Cout, K=K, pad=pad, slot=slot)

    out_flat = pl.pallas_call(
        kernel,
        out_shape=jax.ShapeDtypeStruct((N, Hp, Wp * Cout), x_nchw.dtype),
        grid=(N // Nb,),
        in_specs=[
            pl.BlockSpec((Nb, H, slot), lambda n: (n, 0, 0)),
            pl.BlockSpec((K * slot, Wp * Cout), lambda n: (0, 0)),
            pl.BlockSpec((Hp, Wp * Cout), lambda n: (0, 0)),
        ],
        out_specs=pl.BlockSpec((Nb, Hp, Wp * Cout), lambda n: (n, 0, 0)),
        scratch_shapes=[pltpu.VMEM((Nb, Hp, K * slot), cdt)],
        compiler_params=pltpu.CompilerParams(dimension_semantics=("parallel",)),
    )(x_rows, wb, bias)

    # free reshape (contiguous layout) + one transpose back to PyTorch's NCHW.
    # (If the surrounding model can consume NHWC / the (N, Hp, Wp*Cout) slab directly,
    #  drop this transpose.)
    return jnp.transpose(out_flat.reshape(N, Hp, Wp, Cout), (0, 3, 1, 2))


def reference_forward(x, w_dw, b_dw, w_pw, b_pw, padding=1):
    """Pure-JAX reference matching the PyTorch module (NCHW)."""
    Cin = x.shape[1]
    dw = lax.conv_general_dilated(
        x, w_dw, window_strides=(1, 1), padding=[(padding, padding)] * 2,
        dimension_numbers=("NCHW", "OIHW", "NCHW"), feature_group_count=Cin)
    dw = dw + b_dw[None, :, None, None]
    pw = lax.conv_general_dilated(
        dw, w_pw, window_strides=(1, 1), padding=[(padding, padding)] * 2,
        dimension_numbers=("NCHW", "OIHW", "NCHW"))
    pw = pw + b_pw[None, :, None, None]
    return jnp.maximum(pw, 0.0)


if __name__ == "__main__":
    key = jax.random.PRNGKey(0)
    # H=W=14 -> output grid 16x16: Hp=16 (multiple of 8 sublanes) and
    # Wp*Cout = 16*8 = 128 (exactly one lane tile) -> fully dense output stores.
    N, Cin, Cout, H, W = 2, 4, 8, 14, 14
    k1, k2, k3, k4, k5 = jax.random.split(key, 5)

    x = jax.random.normal(k1, (N, Cin, H, W), jnp.float32)
    w_dw = jax.random.normal(k2, (Cin, 1, 3, 3), jnp.float32) * 0.2     # depthwise.weight
    b_dw = jax.random.normal(k3, (Cin,), jnp.float32) * 0.1             # depthwise.bias
    w_pw = jax.random.normal(k4, (Cout, Cin, 1, 1), jnp.float32) * 0.2  # pointwise.weight
    b_pw = jax.random.normal(k5, (Cout,), jnp.float32) * 0.1            # pointwise.bias

    # jit the wrapper so the weight folding is traced/compiled once per weight set.
    fwd = jax.jit(depthwise_separable_conv_block)
    out = fwd(x, w_dw, b_dw, w_pw, b_pw)
    out = jax.block_until_ready(out)

    ref = reference_forward(x, w_dw, b_dw, w_pw, b_pw)
    assert out.shape == ref.shape == (N, Cout, H + 2, W + 2)
    np.testing.assert_allclose(np.asarray(out), np.asarray(ref), rtol=1e-4, atol=1e-4)
    print("KERNEL_OK")
</pallas_src>

<mosaic_0001>
module attributes {stable_mosaic.version = 11 : i64} {
  func.func @_dsconv_kernel(%arg0: i32, %arg1: memref<1x14x128xf32, #tpu.memory_space<vmem>>, %arg2: memref<384x128xf32, #tpu.memory_space<vmem>>, %arg3: memref<16x128xf32, #tpu.memory_space<vmem>>, %arg4: memref<1x16x128xf32, #tpu.memory_space<vmem>>, %arg5: memref<1x16x384xf32, #tpu.memory_space<vmem>>) attributes {dimension_semantics = [#tpu.dimension_semantics<parallel>], iteration_bounds = array<i64: 2>, scalar_prefetch = 0 : i64, scratch_operands = 1 : i64, tpu.core_type = #tpu.core_type<tc>, window_params = [{transform_indices = @transform_0, window_bounds = array<i64: 1, 14, 128>}, {pipeline_mode = #tpu.pipeline_mode<synchronous>, transform_indices = @transform_1, window_bounds = array<i64: 384, 128>}, {pipeline_mode = #tpu.pipeline_mode<synchronous>, transform_indices = @transform_2, window_bounds = array<i64: 16, 128>}, {transform_indices = @transform_3, window_bounds = array<i64: 1, 16, 128>}]} {
    %cst = arith.constant 0.000000e+00 : f32
    %0 = vector.broadcast %cst : f32 to vector<1x1x384xf32>
    %c0 = arith.constant 0 : index
    %c0_0 = arith.constant 0 : index
    %c0_1 = arith.constant 0 : index
    %1 = vector.load %arg5[%c0, %c0_0, %c0_1] : memref<1x16x384xf32, #tpu.memory_space<vmem>>, vector<1x1x384xf32>
    tpu.vector_store %arg5[%c0, %c0_0, %c0_1], %0 {strides = array<i32>} : memref<1x16x384xf32, #tpu.memory_space<vmem>>, vector<1x1x384xf32>,
    %cst_2 = arith.constant 0.000000e+00 : f32
    %2 = vector.broadcast %cst_2 : f32 to vector<1x1x384xf32>
    %c0_3 = arith.constant 0 : index
    %c15 = arith.constant 15 : index
    %c0_4 = arith.constant 0 : index
    %3 = vector.load %arg5[%c0_3, %c15, %c0_4] : memref<1x16x384xf32, #tpu.memory_space<vmem>>, vector<1x1x384xf32>
    tpu.vector_store %arg5[%c0_3, %c15, %c0_4], %2 {strides = array<i32>} : memref<1x16x384xf32, #tpu.memory_space<vmem>>, vector<1x1x384xf32>,
    %cst_5 = arith.constant 0.000000e+00 : f32
    %4 = vector.broadcast %cst_5 : f32 to vector<1x1x128xf32>
    %c0_6 = arith.constant 0 : index
    %c1 = arith.constant 1 : index
    %c0_7 = arith.constant 0 : index
    %5 = vector.load %arg5[%c0_6, %c1, %c0_7] : memref<1x16x384xf32, #tpu.memory_space<vmem>>, vector<1x1x128xf32>
    tpu.vector_store %arg5[%c0_6, %c1, %c0_7], %4 {strides = array<i32>} : memref<1x16x384xf32, #tpu.memory_space<vmem>>, vector<1x1x128xf32>,
    %cst_8 = arith.constant 0.000000e+00 : f32
    %6 = vector.broadcast %cst_8 : f32 to vector<1x1x128xf32>
    %c0_9 = arith.constant 0 : index
    %c14 = arith.constant 14 : index
    %c256 = arith.constant 256 : index
    %7 = vector.load %arg5[%c0_9, %c14, %c256] : memref<1x16x384xf32, #tpu.memory_space<vmem>>, vector<1x1x128xf32>
    tpu.vector_store %arg5[%c0_9, %c14, %c256], %6 {strides = array<i32>} : memref<1x16x384xf32, #tpu.memory_space<vmem>>, vector<1x1x128xf32>,
    %c0_10 = arith.constant 0 : index
    %c0_11 = arith.constant 0 : index
    %c0_12 = arith.constant 0 : index
    %8 = vector.load %arg1[%c0_10, %c0_11, %c0_12] : memref<1x14x128xf32, #tpu.memory_space<vmem>>, vector<1x14x128xf32>
    %9 = vector.extract_strided_slice %8 {offsets = [0, 0, 0], sizes = [1, 13, 128], strides = [1, 1, 1]} : vector<1x14x128xf32> to vector<1x13x128xf32>
    %c0_13 = arith.constant 0 : index
    %c2 = arith.constant 2 : index
    %c0_14 = arith.constant 0 : index
    %10 = vector.load %arg5[%c0_13, %c2, %c0_14] : memref<1x16x384xf32, #tpu.memory_space<vmem>>, vector<1x13x128xf32>
    tpu.vector_store %arg5[%c0_13, %c2, %c0_14], %9 {strides = array<i32>} : memref<1x16x384xf32, #tpu.memory_space<vmem>>, vector<1x13x128xf32>,
    %c0_15 = arith.constant 0 : index
    %c1_16 = arith.constant 1 : index
    %c128 = arith.constant 128 : index
    %11 = vector.load %arg5[%c0_15, %c1_16, %c128] : memref<1x16x384xf32, #tpu.memory_space<vmem>>, vector<1x14x128xf32>
    tpu.vector_store %arg5[%c0_15, %c1_16, %c128], %8 {strides = array<i32>} : memref<1x16x384xf32, #tpu.memory_space<vmem>>, vector<1x14x128xf32>,
    %12 = vector.extract_strided_slice %8 {offsets = [0, 1, 0], sizes = [1, 13, 128], strides = [1, 1, 1]} : vector<1x14x128xf32> to vector<1x13x128xf32>
    %c0_17 = arith.constant 0 : index
    %c1_18 = arith.constant 1 : index
    %c256_19 = arith.constant 256 : index
    %13 = vector.load %arg5[%c0_17, %c1_18, %c256_19] : memref<1x16x384xf32, #tpu.memory_space<vmem>>, vector<1x13x128xf32>
    tpu.vector_store %arg5[%c0_17, %c1_18, %c256_19], %12 {strides = array<i32>} : memref<1x16x384xf32, #tpu.memory_space<vmem>>, vector<1x13x128xf32>,
    %c0_20 = arith.constant 0 : index
    %c0_21 = arith.constant 0 : index
    %c0_22 = arith.constant 0 : index
    %14 = vector.load %arg5[%c0_20, %c0_21, %c0_22] : memref<1x16x384xf32, #tpu.memory_space<vmem>>, vector<1x16x384xf32>
    %15 = vector.shape_cast %14 : vector<1x16x384xf32> to vector<16x384xf32>
    %c0_23 = arith.constant 0 : index
    %c0_24 = arith.constant 0 : index
    %16 = vector.load %arg2[%c0_23, %c0_24] : memref<384x128xf32, #tpu.memory_space<vmem>>, vector<384x128xf32>
    %cst_25 = arith.constant dense<0.000000e+00> : vector<16x128xf32>
    %17 = tpu.matmul %15, %16, %cst_25 {dimension_numbers = #tpu.dot_dimension_numbers<[1], [0], [0], [1], [0, 0, 1, 1], [], []>} : vector<16x384xf32>, vector<384x128xf32>, vector<16x128xf32> -> vector<16x128xf32>
    %18 = vector.shape_cast %17 : vector<16x128xf32> to vector<1x16x128xf32>
    %c0_26 = arith.constant 0 : index
    %c0_27 = arith.constant 0 : index
    %19 = vector.load %arg3[%c0_26, %c0_27] : memref<16x128xf32, #tpu.memory_space<vmem>>, vector<16x128xf32>
    %20 = vector.shape_cast %19 : vector<16x128xf32> to vector<1x16x128xf32>
    %21 = arith.addf %18, %20 : vector<1x16x128xf32>
    %cst_28 = arith.constant 0.000000e+00 : f32
    %22 = vector.broadcast %cst_28 : f32 to vector<1x16x128xf32>
    %23 = arith.maximumf %21, %22 : vector<1x16x128xf32>
    %c0_29 = arith.constant 0 : index
    %c0_30 = arith.constant 0 : index
    %c0_31 = arith.constant 0 : index
    %24 = vector.load %arg4[%c0_29, %c0_30, %c0_31] : memref<1x16x128xf32, #tpu.memory_space<vmem>>, vector<1x16x128xf32>
    tpu.vector_store %arg4[%c0_29, %c0_30, %c0_31], %23 {strides = array<i32>} : memref<1x16x128xf32, #tpu.memory_space<vmem>>, vector<1x16x128xf32>,
    return
  }
  func.func @transform_0(%arg0: i32) -> (i32, i32, i32) {
    %c0_i32 = arith.constant 0 : i32
    %c0_i32_0 = arith.constant 0 : i32
    %c0_i32_1 = arith.constant 0 : i32
    return %arg0, %c0_i32, %c0_i32_0 : i32, i32, i32
  }
  func.func @transform_1(%arg0: i32) -> (i32, i32) {
    %c0_i32 = arith.constant 0 : i32
    %c0_i32_0 = arith.constant 0 : i32
    %c0_i32_1 = arith.constant 0 : i32
    return %c0_i32, %c0_i32_0 : i32, i32
  }
  func.func @transform_2(%arg0: i32) -> (i32, i32) {
    %c0_i32 = arith.constant 0 : i32
    %c0_i32_0 = arith.constant 0 : i32
    %c0_i32_1 = arith.constant 0 : i32
    return %c0_i32, %c0_i32_0 : i32, i32
  }
  func.func @transform_3(%arg0: i32) -> (i32, i32, i32) {
    %c0_i32 = arith.constant 0 : i32
    %c0_i32_0 = arith.constant 0 : i32
    %c0_i32_1 = arith.constant 0 : i32
    return %arg0, %c0_i32, %c0_i32_0 : i32, i32, i32
  }
}

</mosaic_0001>

<llo_original>
// kernel: depthwise_separable_conv_block.1
$region0: #{depthwise_separable_conv_block.1}
  #allocation0 [shape = 'u32[]', space=smem, size = 0x4, offset = 0x4, fixed_abs, tag = 'smem constant byte address 0x4 - core index']
  #allocation1 [shape = 'u32[144,128]{1,0:T(1,128)}', space=vmem, size = 0x12000, scoped, tag = 'internal scratch']
  #allocation2 [shape = 'f32[1,16,384]{2,1,0:T(8,128)}', space=vmem, size = 0x6000, scoped, tag = 'scratch operand']
  %s0 = inlined_call_operand.vmem [shape: f32[2,14,128], index: 0, kind: input, shape index: {}]
  %s1 = inlined_call_operand.vmem [shape: f32[384,128], index: 1, kind: input, shape index: {}]
  %s2 = inlined_call_operand.vmem [shape: f32[16,128], index: 2, kind: input, shape index: {}]
  %s3 = inlined_call_operand.vmem [shape: f32[2,16,128], index: 3, kind: output, shape index: {}]
  %s4 = sld [smem:[#allocation0]]
  $region45: #{depthwise_separable_conv_block.1} parent=0
    _
  %s6 = ssub.s32 1, %s4
  %s7 = scalar_select 0, %s6, %s4
  loop: start=0, step=1, limit=4
  $region2: #{depthwise_separable_conv_block.1} parent=0 // loop_pre_header
    _
  $region3: #{depthwise_separable_conv_block.1} parent=0 // loop_header
    %s9 = sphi 0, %s13
    %p10 = scmp.ge.s32.totalorder %s9, 4
    %s19 = sphi 0, %s21
    %s22 = sphi 0, %s19
    %s23 = sphi 0, %s22
    %s39 = sphi 0, %s23
    %s43 = sphi 0, %s43
    %s45 = sphi 0, %s43
    %s46 = sphi 0, %s45
    %s60 = sphi 0, %s46
    %s64 = sphi 0, %s64
    %s66 = sphi 0, %s64
    %s67 = sphi 0, %s66
    %s81 = sphi 0, %s67
    %s87 = sphi 0, %s89
    %s90 = sphi 0, %s87
    %s91 = sphi 0, %s90
    %s107 = sphi 0, %s91
  $region4: #{depthwise_separable_conv_block.1} parent=0 // loop_header_branch
    %12 = sbr.rel (%p10) target = $region8
  $region5: #{depthwise_separable_conv_block.1} parent=0 // loop_body
    %s14 = ssub.s32 %s9, 1
    %s15 = ssub.s32 %s9, 2
    %s16 = sadd.s32 %s9, 1
    %s17 = ssub.s32 %s9, %s16
    %p18 = scmp.eq.s32.totalorder %s17, 0
    %s20 = sadd.s32 %s19, 1
    %s21 = scalar_select %p18, %s19, %s20
    %p24 = pneg %p18
    %p25 = scmp.eq.s32.totalorder %s9, 1
    %p26 = por %p24, %p25
    %p27 = scmp.ne.s32.totalorder %s19, %s22
    %p28 = scmp.eq.s32.totalorder %s9, 0
    %p29 = por %p27, %p28
    %p30 = scmp.ne.s32.totalorder %s19, %s22
    %p31 = scmp.eq.s32.totalorder %s14, 1
    %p32 = por %p30, %p31
    %p33 = scmp.ne.s32.totalorder %s22, %s23
    %p34 = scmp.eq.s32.totalorder %s14, 0
    %p35 = por %p33, %p34
    %p36 = scmp.ne.s32.totalorder %s22, %s23
    %p37 = scmp.eq.s32.totalorder %s15, 1
    %p38 = por %p36, %p37
    %p40 = scmp.ne.s32.totalorder %s23, %s39
    %p41 = scmp.eq.s32.totalorder %s15, 0
    %p42 = por %p40, %p41
    %s44 = sadd.s32 %s43, 1
    %p47 = scmp.eq.s32.totalorder %s9, 1
    %p48 = scmp.ne.s32.totalorder %s43, %s45
    %p49 = scmp.eq.s32.totalorder %s9, 0
    %p50 = por %p48, %p49
    %p51 = scmp.ne.s32.totalorder %s43, %s45
    %p52 = scmp.eq.s32.totalorder %s14, 1
    %p53 = por %p51, %p52
    %p54 = scmp.ne.s32.totalorder %s45, %s46
    %p55 = scmp.eq.s32.totalorder %s14, 0
    %p56 = por %p54, %p55
    %p57 = scmp.ne.s32.totalorder %s45, %s46
    %p58 = scmp.eq.s32.totalorder %s15, 1
    %p59 = por %p57, %p58
    %p61 = scmp.ne.s32.totalorder %s46, %s60
    %p62 = scmp.eq.s32.totalorder %s15, 0
    %p63 = por %p61, %p62
    %s65 = sadd.s32 %s64, 1
    %p68 = scmp.eq.s32.totalorder %s9, 1
    %p69 = scmp.ne.s32.totalorder %s64, %s66
    %p70 = scmp.eq.s32.totalorder %s9, 0
    %p71 = por %p69, %p70
    %p72 = scmp.ne.s32.totalorder %s64, %s66
    %p73 = scmp.eq.s32.totalorder %s14, 1
    %p74 = por %p72, %p73
    %p75 = scmp.ne.s32.totalorder %s66, %s67
    %p76 = scmp.eq.s32.totalorder %s14, 0
    %p77 = por %p75, %p76
    %p78 = scmp.ne.s32.totalorder %s66, %s67
    %p79 = scmp.eq.s32.totalorder %s15, 1
    %p80 = por %p78, %p79
    %p82 = scmp.ne.s32.totalorder %s67, %s81
    %p83 = scmp.eq.s32.totalorder %s15, 0
    %p84 = por %p82, %p83
    %s85 = ssub.s32 %s9, %s16
    %p86 = scmp.eq.s32.totalorder %s85, 0
    %s88 = sadd.s32 %s87, 1
    %s89 = scalar_select %p86, %s87, %s88
    %p92 = pneg %p86
    %p93 = scmp.eq.s32.totalorder %s9, 1
    %p94 = por %p92, %p93
    %p95 = scmp.ne.s32.totalorder %s87, %s90
    %p96 = scmp.eq.s32.totalorder %s9, 0
    %p97 = por %p95, %p96
    %p98 = scmp.ne.s32.totalorder %s87, %s90
    %p99 = scmp.eq.s32.totalorder %s14, 1
    %p100 = por %p98, %p99
    %p101 = scmp.ne.s32.totalorder %s90, %s91
    %p102 = scmp.eq.s32.totalorder %s14, 0
    %p103 = por %p101, %p102
    %p104 = scmp.ne.s32.totalorder %s90, %s91
    %p105 = scmp.eq.s32.totalorder %s15, 1
    %p106 = por %p104, %p105
    %p108 = scmp.ne.s32.totalorder %s91, %s107
    %p109 = scmp.eq.s32.totalorder %s15, 0
    %p110 = por %p108, %p109
    %p111 = scmp.le.s32.totalorder 1, %s9
    %p112 = scmp.lt.s32.totalorder %s9, 3
    %p113 = pnand %p111, %p112
    %p114 = pneg %p113
    // Predicated region
    $region9: #{depthwise_separable_conv_block.1} parent=5 // pred_check
      _
    $region10: #{depthwise_separable_conv_block.1} parent=5 // pred_check_branch
      %116 = sbr.rel (%p113) target = $region12
    $region11: #{depthwise_separable_conv_block.1} parent=5 // pred_region
      %s117 = ssub.s32 %s9, 1
      // Predicated region
      $region13: #{depthwise_separable_conv_block.1} parent=11 // pred_check
        %p118 = pneg %p56
      $region14: #{depthwise_separable_conv_block.1} parent=11 // pred_check_branch
        %120 = sbr.rel (%p118) target = $region16
      $region15: #{depthwise_separable_conv_block.1} parent=11 // pred_region
        _
      $region16: #{depthwise_separable_conv_block.1} parent=11 // pred_fallthru
        _
      // Predicated region
      $region17: #{depthwise_separable_conv_block.1} parent=11 // pred_check
        %p121 = pneg %p77
      $region18: #{depthwise_separable_conv_block.1} parent=11 // pred_check_branch
        %123 = sbr.rel (%p121) target = $region20
      $region19: #{depthwise_separable_conv_block.1} parent=11 // pred_region
        _
      $region20: #{depthwise_separable_conv_block.1} parent=11 // pred_fallthru
        _
    $region12: #{depthwise_separable_conv_block.1} parent=5 // pred_fallthru
      _
    %p124 = scmp.lt.s32.totalorder %s9, 2
    // Predicated region
    $region21: #{depthwise_separable_conv_block.1} parent=5 // pred_check
      %p125 = pneg %p124
    $region22: #{depthwise_separable_conv_block.1} parent=5 // pred_check_branch
      %127 = sbr.rel (%p125) target = $region24
    $region23: #{depthwise_separable_conv_block.1} parent=5 // pred_region
      // Predicated region
      $region25: #{depthwise_separable_conv_block.1} parent=23 // pred_check
        %p128 = pneg %p29
      $region26: #{depthwise_separable_conv_block.1} parent=23 // pred_check_branch
        %130 = sbr.rel (%p128) target = $region28
      $region27: #{depthwise_separable_conv_block.1} parent=23 // pred_region
        %p131 = scmp.lt.s32.totalorder %s9, 1
        %s132 = scalar_select %p131, %s9, 1
        %s133 = smul.addr %s132, 2
        %s134 = smul.addr %s133, 8
        %s135 = scalar_lea.vmem %s0, %s134
      $region28: #{depthwise_separable_conv_block.1} parent=23 // pred_fallthru
        _
    $region24: #{depthwise_separable_conv_block.1} parent=5 // pred_fallthru
      _
    %p136 = scmp.le.s32.totalorder 1, %s9
    %p137 = scmp.lt.s32.totalorder %s9, 3
    %p138 = pnand %p136, %p137
    %p139 = pneg %p138
    // Predicated region
    $region29: #{depthwise_separable_conv_block.1} parent=5 // pred_check
      _
    $region30: #{depthwise_separable_conv_block.1} parent=5 // pred_check_branch
      %141 = sbr.rel (%p138) target = $region32
    $region31: #{depthwise_separable_conv_block.1} parent=5 // pred_region
      %s142 = ssub.s32 %s9, 1
      %p143 = scmp.lt.s32.totalorder %s14, 1
      %s144 = scalar_select %p143, %s14, 1
      %s145 = smul.addr %s144, 2
      %s146 = smul.addr %s145, 8
      %s147 = scalar_lea.vmem %s0, %s146
      %p148 = pneg %p35
      %p149 = pneg %p32
      %p150 = pneg %p56
      %p151 = pneg %p53
      %p152 = pneg %p77
      %p153 = pneg %p74
      %p154 = pneg %p103
      %p155 = pneg %p100
      %p156 = scmp.lt.s32.totalorder %s14, 1
      %s157 = scalar_select %p156, %s14, 1
      %s158 = smul.addr %s157, 2
      %s159 = smul.addr %s158, 8
      %s160 = scalar_lea.vmem %s3, %s159
      %p161 = scmp.lt.s32.totalorder %s14, 1
      %s162 = scalar_select %p161, %s14, 1
      %s163 = smul.addr %s162, 2
      %s164 = smul.addr %s163, 8
      %s165 = scalar_lea.vmem %s0, %s164
      %p166 = scmp.lt.s32.totalorder %s14, 1
      %s167 = scalar_select %p166, %s14, 1
      %s168 = smul.addr %s167, 2
      %s169 = smul.addr %s168, 8
      %s170 = scalar_lea.vmem %s3, %s169
      %v171 = vlaneseq
      %vm172 = vcmp.ge.s32.totalorder %v171, 0
      %vm173 = vcmp.lt.s32.totalorder %v171, 384
      %vm174 = vmand %vm172, %vm173
      %175 = vst.msk [vmem:[#allocation2] ss:$8 sm:$0x7] %vm174, 0.0
      %176 = vst.msk [vmem:[#allocation2] ss:$8 sm:$0x0] %vm174, 0.0
      %s177 = scalar_lea.vmem [#allocation2], 31
      %178 = vst.msk [vmem:[%s177] ss:$8 sm:$0x7] %vm174, 0.0
      %179 = vst.msk [vmem:[%s177] ss:$8 sm:$0x0] %vm174, 0.0
      %180 = vst [vmem:[#allocation2 + $0x1] sm:$0x1] 0.0
      %181 = vst [vmem:[#allocation2 + $0x2e] sm:$0x1] 0.0
      %v182 = vld [vmem:[%s165] sm:$0xff]
      %v183 = vld [vmem:[%s165 + $0x8] sm:$0x3f]
      %vm186 = vcmask 1041408
      %v187 = vrot.slane %v182, 6
      %v188 = vrot.slane %v183, 6
      %v189 = vsel %vm186, %v187, %v188
      %192 = vst [vmem:[#allocation2] sm:$0xfc] %v187
      %193 = vst [vmem:[#allocation2 + $0x18] sm:$0x7f] %v189
      %vm194 = vcmask 1040384
      %v195 = vrot.slane %v182, 7
      %v196 = vrot.slane %v183, 7
      %v197 = vsel %vm194, %v195, %v196
      %200 = vst [vmem:[#allocation2 + $0x8] sm:$0xfe] %v195
      %201 = vst [vmem:[#allocation2 + $0x20] sm:$0x7f] %v197
      %202 = vst [vmem:[#allocation2 + $0x10] sm:$0xfe] %v182
      %203 = vst [vmem:[#allocation2 + $0x28] sm:$0x3f] %v183
      %v204 = vld [vmem:[#allocation2] sm:$0xff]
      %v205 = vld [vmem:[#allocation2 + $0x8] sm:$0xff]
      %v206 = vld [vmem:[#allocation2 + $0x10] sm:$0xff]
      %v207 = vld [vmem:[#allocation2 + $0x18] sm:$0xff]
      %v208 = vld [vmem:[#allocation2 + $0x20] sm:$0xff]
      %v209 = vld [vmem:[#allocation2 + $0x28] sm:$0xff]
      %v210 = vld [vmem:[%s1] sm:$0xff]
      %v211 = vld [vmem:[%s1 + $0x8] sm:$0xff]
      %v212 = vld [vmem:[%s1 + $0x10] sm:$0xff]
      %v213 = vld [vmem:[%s1 + $0x18] sm:$0xff]
      %v214 = vld [vmem:[%s1 + $0x20] sm:$0xff]
      %v215 = vld [vmem:[%s1 + $0x28] sm:$0xff]
      %v216 = vld [vmem:[%s1 + $0x30] sm:$0xff]
      %v217 = vld [vmem:[%s1 + $0x38] sm:$0xff]
      %v218 = vld [vmem:[%s1 + $0x40] sm:$0xff]
      %v219 = vld [vmem:[%s1 + $0x48] sm:$0xff]
      %v220 = vld [vmem:[%s1 + $0x50] sm:$0xff]
      %v221 = vld [vmem:[%s1 + $0x58] sm:$0xff]
      %v222 = vld [vmem:[%s1 + $0x60] sm:$0xff]
      %v223 = vld [vmem:[%s1 + $0x68] sm:$0xff]
      %v224 = vld [vmem:[%s1 + $0x70] sm:$0xff]
      %v225 = vld [vmem:[%s1 + $0x78] sm:$0xff]
      %v226 = vld [vmem:[%s1 + $0x80] sm:$0xff]
      %v227 = vld [vmem:[%s1 + $0x88] sm:$0xff]
      %v228 = vld [vmem:[%s1 + $0x90] sm:$0xff]
      %v229 = vld [vmem:[%s1 + $0x98] sm:$0xff]
      %v230 = vld [vmem:[%s1 + $0xa0] sm:$0xff]
      %v231 = vld [vmem:[%s1 + $0xa8] sm:$0xff]
      %v232 = vld [vmem:[%s1 + $0xb0] sm:$0xff]
      %v233 = vld [vmem:[%s1 + $0xb8] sm:$0xff]
      %v234 = vld [vmem:[%s1 + $0xc0] sm:$0xff]
      %v235 = vld [vmem:[%s1 + $0xc8] sm:$0xff]
      %v236 = vld [vmem:[%s1 + $0xd0] sm:$0xff]
      %v237 = vld [vmem:[%s1 + $0xd8] sm:$0xff]
      %v238 = vld [vmem:[%s1 + $0xe0] sm:$0xff]
      %v239 = vld [vmem:[%s1 + $0xe8] sm:$0xff]
      %v240 = vld [vmem:[%s1 + $0xf0] sm:$0xff]
      %v241 = vld [vmem:[%s1 + $0xf8] sm:$0xff]
      %v242 = vld [vmem:[%s1 + $0x100] sm:$0xff]
      %v243 = vld [vmem:[%s1 + $0x108] sm:$0xff]
      %v244 = vld [vmem:[%s1 + $0x110] sm:$0xff]
      %v245 = vld [vmem:[%s1 + $0x118] sm:$0xff]
      %v246 = vld [vmem:[%s1 + $0x120] sm:$0xff]
      %v247 = vld [vmem:[%s1 + $0x128] sm:$0xff]
      %v248 = vld [vmem:[%s1 + $0x130] sm:$0xff]
      %v249 = vld [vmem:[%s1 + $0x138] sm:$0xff]
      %v250 = vld [vmem:[%s1 + $0x140] sm:$0xff]
      %v251 = vld [vmem:[%s1 + $0x148] sm:$0xff]
      %v252 = vld [vmem:[%s1 + $0x150] sm:$0xff]
      %v253 = vld [vmem:[%s1 + $0x158] sm:$0xff]
      %v254 = vld [vmem:[%s1 + $0x160] sm:$0xff]
      %v255 = vld [vmem:[%s1 + $0x168] sm:$0xff]
      %v256 = vld [vmem:[%s1 + $0x170] sm:$0xff]
      %v257 = vld [vmem:[%s1 + $0x178] sm:$0xff]
      %258 = vmatprep.subr.mxu0 0.0
      %259 = vmatpush1.msra.mxu0 %v210
      %260 = vmatprep.subr.mxu0 0.0
      %261 = vmatpush1.msra.mxu0 %v211
      %262 = vmatprep.subr.mxu0 0.0
      %263 = vmatpush1.msra.mxu0 %v212
      %264 = vmatprep.subr.mxu0 0.0
      %265 = vmatpush1.msra.mxu0 %v213
      %266 = vmatprep.subr.mxu0 0.0
      %267 = vmatpush1.msra.mxu0 %v214
      %268 = vmatprep.subr.mxu0 0.0
      %269 = vmatpush1.msra.mxu0 %v215
      %270 = vmatprep.subr.mxu0 0.0
      %271 = vmatpush1.msra.mxu0 %v216
      %272 = vmatprep.subr.mxu0 0.0
      %273 = vmatpush1.msra.mxu0 %v217
      %274 = vmatprep.subr.mxu0 0.0
      %275 = vmatpush1.msra.mxu0 %v218
      %276 = vmatprep.subr.mxu0 0.0
      %277 = vmatpush1.msra.mxu0 %v219
      %278 = vmatprep.subr.mxu0 0.0
      %279 = vmatpush1.msra.mxu0 %v220
      %280 = vmatprep.subr.mxu0 0.0
      %281 = vmatpush1.msra.mxu0 %v221
      %282 = vmatprep.subr.mxu0 0.0
      %283 = vmatpush1.msra.mxu0 %v222
      %284 = vmatprep.subr.mxu0 0.0
      %285 = vmatpush1.msra.mxu0 %v223
      %286 = vmatprep.subr.mxu0 0.0
      %287 = vmatpush1.msra.mxu0 %v224
      %288 = vmatprep.subr.mxu0 0.0
      %289 = vmatpush1.msra.mxu0 %v225
      %290 = vmatprep.subr.mxu0 0.0
      %291 = vmatpush1.msra.mxu0 %v226
      %292 = vmatprep.subr.mxu0 0.0
      %293 = vmatpush1.msra.mxu0 %v227
      %294 = vmatprep.subr.mxu0 0.0
      %295 = vmatpush1.msra.mxu0 %v228
      %296 = vmatprep.subr.mxu0 0.0
      %297 = vmatpush1.msra.mxu0 %v229
      %298 = vmatprep.subr.mxu0 0.0
      %299 = vmatpush1.msra.mxu0 %v230
      %300 = vmatprep.subr.mxu0 0.0
      %301 = vmatpush1.msra.mxu0 %v231
      %302 = vmatprep.subr.mxu0 0.0
      %303 = vmatpush1.msra.mxu0 %v232
      %304 = vmatprep.subr.mxu0 0.0
      %305 = vmatpush1.msra.mxu0 %v233
      %306 = vmatprep.subr.mxu0 0.0
      %307 = vmatpush1.msra.mxu0 %v234
      %308 = vmatprep.subr.mxu0 0.0
      %309 = vmatpush1.msra.mxu0 %v235
      %310 = vmatprep.subr.mxu0 0.0
      %311 = vmatpush1.msra.mxu0 %v236
      %312 = vmatprep.subr.mxu0 0.0
      %313 = vmatpush1.msra.mxu0 %v237
      %314 = vmatprep.subr.mxu0 0.0
      %315 = vmatpush1.msra.mxu0 %v238
      %316 = vmatprep.subr.mxu0 0.0
      %317 = vmatpush1.msra.mxu0 %v239
      %318 = vmatprep.subr.mxu0 0.0
      %319 = vmatpush1.msra.mxu0 %v240
      %320 = vmatprep.subr.mxu0 0.0
      %321 = vmatpush1.msra.mxu0 %v241
      %322 = vmatprep.mubr.f32.mxu0 %v205
      %323 = vmatmul.mubr.f32.gmra.mrb[0].mxu0 %v204
      %v324 = vpop.f32.mrb[0].mxu0
      %v325 = vadd.f32 0.0, %v324
      %v326 = vpop.f32.mrb[0].mxu0
      %327 = vmatprep.mubr.f32.mxu0 %v208
      %328 = vmatmul.mubr.f32.gmra.mrb[0].mxu0 %v207
      %v329 = vpop.f32.mrb[0].mxu0
      %v330 = vadd.f32 0.0, %v329
      %v331 = vpop.f32.mrb[0].mxu0
      %332 = vdwg.mxu0
      %333 = vmatprep.subr.mxu0 0.0
      %334 = vmatpush1.msra.mxu0 %v242
      %335 = vmatprep.subr.mxu0 0.0
      %336 = vmatpush1.msra.mxu0 %v243
      %337 = vmatprep.subr.mxu0 0.0
      %338 = vmatpush1.msra.mxu0 %v244
      %339 = vmatprep.subr.mxu0 0.0
      %340 = vmatpush1.msra.mxu0 %v245
      %341 = vmatprep.subr.mxu0 0.0
      %342 = vmatpush1.msra.mxu0 %v246
      %343 = vmatprep.subr.mxu0 0.0
      %344 = vmatpush1.msra.mxu0 %v247
      %345 = vmatprep.subr.mxu0 0.0
      %346 = vmatpush1.msra.mxu0 %v248
      %347 = vmatprep.subr.mxu0 0.0
      %348 = vmatpush1.msra.mxu0 %v249
      %349 = vmatprep.subr.mxu0 0.0
      %350 = vmatpush1.msra.mxu0 %v250
      %351 = vmatprep.subr.mxu0 0.0
      %352 = vmatpush1.msra.mxu0 %v251
      %353 = vmatprep.subr.mxu0 0.0
      %354 = vmatpush1.msra.mxu0 %v252
      %355 = vmatprep.subr.mxu0 0.0
      %356 = vmatpush1.msra.mxu0 %v253
      %357 = vmatprep.subr.mxu0 0.0
      %358 = vmatpush1.msra.mxu0 %v254
      %359 = vmatprep.subr.mxu0 0.0
      %360 = vmatpush1.msra.mxu0 %v255
      %361 = vmatprep.subr.mxu0 0.0
      %362 = vmatpush1.msra.mxu0 %v256
      %363 = vmatprep.subr.mxu0 0.0
      %364 = vmatpush1.msra.mxu0 %v257
      %365 = vmatprep.subr.mxu0 0.0
      %366 = vmatpush1.msra.mxu0 0.0
      %367 = vmatprep.subr.mxu0 0.0
      %368 = vmatpush1.msra.mxu0 0.0
      %369 = vmatprep.subr.mxu0 0.0
      %370 = vmatpush1.msra.mxu0 0.0
      %371 = vmatprep.subr.mxu0 0.0
      %372 = vmatpush1.msra.mxu0 0.0
      %373 = vmatprep.subr.mxu0 0.0
      %374 = vmatpush1.msra.mxu0 0.0
      %375 = vmatprep.subr.mxu0 0.0
      %376 = vmatpush1.msra.mxu0 0.0
      %377 = vmatprep.subr.mxu0 0.0
      %378 = vmatpush1.msra.mxu0 0.0
      %379 = vmatprep.subr.mxu0 0.0
      %380 = vmatpush1.msra.mxu0 0.0
      %381 = vmatprep.subr.mxu0 0.0
      %382 = vmatpush1.msra.mxu0 0.0
      %383 = vmatprep.subr.mxu0 0.0
      %384 = vmatpush1.msra.mxu0 0.0
      %385 = vmatprep.subr.mxu0 0.0
      %386 = vmatpush1.msra.mxu0 0.0
      %387 = vmatprep.subr.mxu0 0.0
      %388 = vmatpush1.msra.mxu0 0.0
      %389 = vmatprep.subr.mxu0 0.0
      %390 = vmatpush1.msra.mxu0 0.0
      %391 = vmatprep.subr.mxu0 0.0
      %392 = vmatpush1.msra.mxu0 0.0
      %393 = vmatprep.subr.mxu0 0.0
      %394 = vmatpush1.msra.mxu0 0.0
      %395 = vmatprep.subr.mxu0 0.0
      %396 = vmatpush1.msra.mxu0 0.0
      %397 = vmatprep.mubr.f32.mxu0 0.0
      %398 = vmatmul.mubr.f32.gmra.mrb[0].mxu0 %v206
      %v399 = vpop.f32.mrb[0].mxu0
      %v400 = vadd.f32 %v325, %v399
      %v401 = vpop.f32.mrb[0].mxu0
      %402 = vmatprep.mubr.f32.mxu0 0.0
      %403 = vmatmul.mubr.f32.gmra.mrb[0].mxu0 %v209
      %v404 = vpop.f32.mrb[0].mxu0
      %v405 = vadd.f32 %v330, %v404
      %v406 = vpop.f32.mrb[0].mxu0
      %407 = vdwg.mxu0
      %v408 = vld [vmem:[%s2] sm:$0xff]
      %v409 = vld [vmem:[%s2 + $0x8] sm:$0xff]
      %v410 = vadd.f32 %v400, %v408
      %v411 = vadd.f32 %v405, %v409
      %v412 = vmax.f32 %v410, 0.0
      %v413 = vmax.f32 %v411, 0.0
      %414 = vst [vmem:[%s170] sm:$0xff] %v412
      %415 = vst [vmem:[%s170 + $0x8] sm:$0xff] %v413
      %p416 = scmp.lt.s32.totalorder %s14, 1
      %s417 = scalar_select %p416, %s14, 1
      %s418 = smul.addr %s417, 2
      %s419 = smul.addr %s418, 8
      %s420 = scalar_lea.vmem %s3, %s419
      // Predicated region
      $region33: #{depthwise_separable_conv_block.1} parent=31 // pred_check
        %p421 = pneg %p100
      $region34: #{depthwise_separable_conv_block.1} parent=31 // pred_check_branch
        %423 = sbr.rel (%p421) target = $region36
      $region35: #{depthwise_separable_conv_block.1} parent=31 // pred_region
        _
      $region36: #{depthwise_separable_conv_block.1} parent=31 // pred_fallthru
        _
    $region32: #{depthwise_separable_conv_block.1} parent=5 // pred_fallthru
      _
    %p424 = scmp.le.s32.totalorder 2, %s9
    // Predicated region
    $region37: #{depthwise_separable_conv_block.1} parent=5 // pred_check
      %p425 = pneg %p424
    $region38: #{depthwise_separable_conv_block.1} parent=5 // pred_check_branch
      %427 = sbr.rel (%p425) target = $region40
    $region39: #{depthwise_separable_conv_block.1} parent=5 // pred_region
      %s428 = ssub.s32 %s9, 2
      // Predicated region
      $region41: #{depthwise_separable_conv_block.1} parent=39 // pred_check
        %p429 = pneg %p106
      $region42: #{depthwise_separable_conv_block.1} parent=39 // pred_check_branch
        %431 = sbr.rel (%p429) target = $region44
      $region43: #{depthwise_separable_conv_block.1} parent=39 // pred_region
        %p432 = scmp.lt.s32.totalorder %s15, 1
        %s433 = scalar_select %p432, %s15, 1
        %s434 = smul.addr %s433, 2
        %s435 = smul.addr %s434, 8
        %s436 = scalar_lea.vmem %s3, %s435
      $region44: #{depthwise_separable_conv_block.1} parent=39 // pred_fallthru
        _
    $region40: #{depthwise_separable_conv_block.1} parent=5 // pred_fallthru
      _
  $region6: #{depthwise_separable_conv_block.1} parent=0 // loop_footer
    %s13 = sadd.s32 1, %s9
  $region7: #{depthwise_separable_conv_block.1} parent=0 // loop_footer_branch
    %8 = sbr.rel target = $region3
  $region8: #{depthwise_separable_conv_block.1} parent=0 // loop_exit
    _

</llo_original>
